<compile_context>
chip_gen: v6e
topology: v6e:2x2x1
jax: 0.10.0
libtpu: 0.0.40
codegen_flags: <defaults>
</compile_context>

<pallas_src>
import functools

import jax
import jax.numpy as jnp
from jax.experimental import pallas as pl
from jax.experimental.pallas import tpu as pltpu

LANE = 128  # packed weight columns / padded logits width (one full lane tile)


# ----------------------------------------------------------------------------
# Kernel: one graph per grid step.
# ----------------------------------------------------------------------------
def aal_hgcn_kernel(x_ref, h_ref, w_ref, out_ref, *, din, offs):
    """x_ref: [N, Din], h_ref: [N, E], w_ref: [R, 128] packed params."""
    o_w1, o_b1, o_w2, o_b2, o_wc1, o_bc1, o_wc2, o_bc2 = offs

    X = x_ref[...]                                   # [N, Din] f32
    H = h_ref[...]                                   # [N, E]   f32

    # Degree scalings: Dv^{-1/2} via EUP rsqrt, De^{-1} via reciprocal.
    dv = jnp.sum(H, axis=1, keepdims=True)           # [N, 1]
    de = jnp.sum(H, axis=0, keepdims=True)           # [1, E]
    dvis = jax.lax.rsqrt(dv + 1e-5)                  # diag(Dv + 1e-5 I)^{-1/2}
    de_inv = pl.reciprocal(de + 1e-5)                # diag(De + 1e-5 I)^{-1} (exact)

    Hs = dvis * H                                    # [N, E] = Dv^{-1/2} H
    A = Hs * de_inv                                  # [N, E] = Dv^{-1/2} H De^{-1}
    HsT = Hs.T                                       # [E, N] tiny in-kernel transpose

    # Static, sublane-aligned slices of the packed parameter slab.
    w1 = w_ref[o_w1:o_w1 + din, :]                   # [Din, 128]
    b1 = w_ref[o_b1:o_b1 + 1, :]                     # [1, 128]
    w2 = w_ref[o_w2:o_w2 + LANE, :]                  # [128, 128]
    b2 = w_ref[o_b2:o_b2 + 1, :]
    wc1 = w_ref[o_wc1:o_wc1 + LANE, :]
    bc1 = w_ref[o_bc1:o_bc1 + 1, :]
    wc2 = w_ref[o_wc2:o_wc2 + LANE, :]
    bc2 = w_ref[o_bc2:o_bc2 + 1, :]

    def hg_layer(x_in, w, b):
        # Reassociated: A @ ((Hs^T @ x) @ W) -- exact in real arithmetic,
        # contracts the node axis into the tiny E axis first.
        m = jnp.dot(HsT, x_in, preferred_element_type=jnp.float32)    # [E, Fin]
        m = jnp.dot(m, w, preferred_element_type=jnp.float32)         # [E, 128]
        return jnp.dot(A, m, preferred_element_type=jnp.float32) + b  # [N, 128]

    # Branch HGCN: two hypergraph conv layers + ReLU.  Zero-padded lanes stay
    # exactly zero through every layer, so the 128-wide math equals the
    # unpadded reference.
    f = jnp.maximum(hg_layer(X, w1, b1), 0.0)        # [N, 128] (real width 64)
    f = jnp.maximum(hg_layer(f, w2, b2), 0.0)        # [N, 128] (real width 32)

    # Classifier: Linear(32->32) + ReLU + Linear(32->num_classes), 128 lanes.
    h1 = jnp.maximum(
        jnp.dot(f, wc1, preferred_element_type=jnp.float32) + bc1, 0.0)
    logits = jnp.dot(h1, wc2, preferred_element_type=jnp.float32) + bc2

    out_ref[...] = logits                            # unmasked lane-dense store


# ----------------------------------------------------------------------------
# One-time parameter packing (hoisted out of the per-call path).
# ----------------------------------------------------------------------------
def _pad_block(a, rows, cols=LANE):
    a = jnp.asarray(a, jnp.float32)
    if a.ndim == 1:
        a = a.reshape(1, -1)
    out = jnp.zeros((rows, cols), jnp.float32)
    return out.at[: a.shape[0], : a.shape[1]].set(a)


def _round8(n):
    return ((n + 7) // 8) * 8


def pack_params(params):
    """Pack every weight/bias into a single [R, 128] f32 slab.

    Piece row counts are rounded to multiples of 8 so in-kernel static slices
    stay sublane-aligned; columns are zero-padded to 128 lanes so every
    intermediate is 128 wide and the final logits store is unmasked.
    """
    din = params["w1"].shape[0]
    pieces = [
        _pad_block(params["w1"], _round8(din)),   # [din_pad, 128]
        _pad_block(params["b1"], 8),
        _pad_block(params["w2"], LANE),
        _pad_block(params["b2"], 8),
        _pad_block(params["wc1"], LANE),
        _pad_block(params["bc1"], 8),
        _pad_block(params["wc2"], LANE),
        _pad_block(params["bc2"], 8),
    ]
    offs, off = [], 0
    for p in pieces:
        offs.append(off)
        off += p.shape[0]
    slab = jnp.concatenate(pieces, axis=0)
    return slab, tuple(offs), din


# ----------------------------------------------------------------------------
# Batched forward wrapper.
# ----------------------------------------------------------------------------
@functools.partial(jax.jit, static_argnums=(3, 4))
def aal_hgcn_forward(x, h, w_slab, offs, din):
    """x: [B, N, Din], h: [B, N, E] -> padded logits [B, N, 128] (f32).

    Real logits are [..., :num_classes]; keep the padded slab downstream
    (mask in the loss) or slice once at the end of the graph.
    """
    B, N, Din = x.shape
    E = h.shape[-1]
    R = w_slab.shape[0]

    kernel = functools.partial(aal_hgcn_kernel, din=din, offs=offs)
    return pl.pallas_call(
        kernel,
        out_shape=jax.ShapeDtypeStruct((B, N, LANE), jnp.float32),
        grid=(B,),
        in_specs=[
            pl.BlockSpec((None, N, Din), lambda b: (b, 0, 0)),
            pl.BlockSpec((None, N, E), lambda b: (b, 0, 0)),
            # Same block every step -> weights stay VMEM-resident across grid.
            pl.BlockSpec((R, LANE), lambda b: (0, 0)),
        ],
        out_specs=pl.BlockSpec((None, N, LANE), lambda b: (b, 0, 0)),
        compiler_params=pltpu.CompilerParams(
            dimension_semantics=("parallel",)),
    )(x, h, w_slab)


# ----------------------------------------------------------------------------
# Parameter init (matches the PyTorch module) and pure-JAX reference.
# ----------------------------------------------------------------------------
def _xavier_uniform(key, shape):
    fan_in, fan_out = shape
    a = jnp.sqrt(6.0 / (fan_in + fan_out))
    return jax.random.uniform(key, shape, jnp.float32, -a, a)


def _linear_init(key, fan_in, fan_out):
    kw, kb = jax.random.split(key)
    bound = 1.0 / jnp.sqrt(float(fan_in))
    w = jax.random.uniform(kw, (fan_in, fan_out), jnp.float32, -bound, bound)
    b = jax.random.uniform(kb, (fan_out,), jnp.float32, -bound, bound)
    return w, b


def make_params(key, dim_aal, hid_dim=64, out_dim=32, num_classes=2):
    k1, k2, k3, k4 = jax.random.split(key, 4)
    w1 = _xavier_uniform(k1, (dim_aal, hid_dim))
    b1 = jnp.zeros((hid_dim,), jnp.float32)
    w2 = _xavier_uniform(k2, (hid_dim, out_dim))
    b2 = jnp.zeros((out_dim,), jnp.float32)
    wc1, bc1 = _linear_init(k3, out_dim, 32)
    wc2, bc2 = _linear_init(k4, 32, num_classes)
    return dict(w1=w1, b1=b1, w2=w2, b2=b2, wc1=wc1, bc1=bc1, wc2=wc2, bc2=bc2)


def reference_forward(x, h, p):
    """Unfused reference for a single graph (mirrors the PyTorch module)."""
    dv = h.sum(1, keepdims=True)
    de = h.sum(0, keepdims=True)
    dvi = 1.0 / jnp.sqrt(dv + 1e-5)
    dei = 1.0 / (de + 1e-5)
    A = dvi * h * dei
    Hs = dvi * h

    def layer(xin, w, b):
        return A @ (Hs.T @ (xin @ w)) + b

    f = jax.nn.relu(layer(x, p["w1"], p["b1"]))
    f = jax.nn.relu(layer(f, p["w2"], p["b2"]))
    h1 = jax.nn.relu(f @ p["wc1"] + p["bc1"])
    return h1 @ p["wc2"] + p["bc2"]


if __name__ == "__main__":
    key = jax.random.PRNGKey(0)
    k_x, k_h, k_p = jax.random.split(key, 3)

    B, N, E, dim_aal = 4, 16, 8, 16   # graphs, nodes, hyperedges, node features
    x = jax.random.normal(k_x, (B, N, dim_aal), jnp.float32)
    h = (jax.random.uniform(k_h, (B, N, E)) < 0.4).astype(jnp.float32)

    params = make_params(k_p, dim_aal, hid_dim=64, out_dim=32, num_classes=2)
    num_classes = params["wc2"].shape[1]

    # One-time packing of all weights/biases into a single 128-lane slab.
    w_slab, offs, din = pack_params(params)

    out_padded = jax.block_until_ready(aal_hgcn_forward(x, h, w_slab, offs, din))
    assert out_padded.shape == (B, N, LANE)

    # Slice the real classes out once at the end (or keep padded + mask in loss).
    out = out_padded[:, :, :num_classes]
    ref = jnp.stack([reference_forward(x[b], h[b], params) for b in range(B)])
    assert jnp.allclose(out, ref, atol=1e-3, rtol=1e-3), float(
        jnp.max(jnp.abs(out - ref)))

    print("KERNEL_OK")
</pallas_src>

<mosaic_0001>
module attributes {stable_mosaic.version = 11 : i64} {
  func.func @aal_hgcn_kernel(%arg0: i32, %arg1: memref<1x16x16xf32, #tpu.memory_space<vmem>>, %arg2: memref<1x16x8xf32, #tpu.memory_space<vmem>>, %arg3: memref<432x128xf32, #tpu.memory_space<vmem>>, %arg4: memref<1x16x128xf32, #tpu.memory_space<vmem>>) attributes {dimension_semantics = [#tpu.dimension_semantics<parallel>], iteration_bounds = array<i64: 4>, scalar_prefetch = 0 : i64, scratch_operands = 0 : i64, tpu.core_type = #tpu.core_type<tc>, window_params = [{transform_indices = @transform_0, window_bounds = array<i64: 1, 16, 16>}, {transform_indices = @transform_1, window_bounds = array<i64: 1, 16, 8>}, {pipeline_mode = #tpu.pipeline_mode<synchronous>, transform_indices = @transform_2, window_bounds = array<i64: 432, 128>}, {transform_indices = @transform_3, window_bounds = array<i64: 1, 16, 128>}]} {
    %c0 = arith.constant 0 : index
    %c0_0 = arith.constant 0 : index
    %c0_1 = arith.constant 0 : index
    %0 = vector.load %arg1[%c0, %c0_0, %c0_1] : memref<1x16x16xf32, #tpu.memory_space<vmem>>, vector<1x16x16xf32>
    %1 = vector.shape_cast %0 : vector<1x16x16xf32> to vector<16x16xf32>
    %c0_2 = arith.constant 0 : index
    %c0_3 = arith.constant 0 : index
    %c0_4 = arith.constant 0 : index
    %2 = vector.load %arg2[%c0_2, %c0_3, %c0_4] : memref<1x16x8xf32, #tpu.memory_space<vmem>>, vector<1x16x8xf32>
    %3 = vector.shape_cast %2 : vector<1x16x8xf32> to vector<16x8xf32>
    %cst = arith.constant dense<0.000000e+00> : vector<16xf32>
    %4 = vector.multi_reduction <add>, %3, %cst [1] : vector<16x8xf32> to vector<16xf32>
    %5 = vector.shape_cast %4 : vector<16xf32> to vector<16x1xf32>
    %cst_5 = arith.constant dense<0.000000e+00> : vector<8xf32>
    %6 = vector.multi_reduction <add>, %3, %cst_5 [0] : vector<16x8xf32> to vector<8xf32>
    %7 = vector.shape_cast %6 : vector<8xf32> to vector<1x8xf32>
    %cst_6 = arith.constant 9.99999974E-6 : f32
    %8 = vector.broadcast %cst_6 : f32 to vector<16x1xf32>
    %9 = arith.addf %5, %8 : vector<16x1xf32>
    %10 = math.rsqrt %9 : vector<16x1xf32>
    %cst_7 = arith.constant 9.99999974E-6 : f32
    %11 = vector.broadcast %cst_7 : f32 to vector<1x8xf32>
    %12 = arith.addf %7, %11 : vector<1x8xf32>
    %13 = tpu.reciprocal %12 : vector<1x8xf32> -> vector<1x8xf32>
    %14 = vector.broadcast %10 : vector<16x1xf32> to vector<16x8xf32>
    %15 = arith.mulf %14, %3 : vector<16x8xf32>
    %16 = vector.broadcast %13 : vector<1x8xf32> to vector<16x8xf32>
    %17 = arith.mulf %15, %16 : vector<16x8xf32>
    %18 = tpu.transpose %15, [1, 0] : vector<16x8xf32> -> vector<8x16xf32>
    %c0_8 = arith.constant 0 : index
    %c0_9 = arith.constant 0 : index
    %19 = vector.load %arg3[%c0_8, %c0_9] : memref<432x128xf32, #tpu.memory_space<vmem>>, vector<16x128xf32>
    %c16 = arith.constant 16 : index
    %c0_10 = arith.constant 0 : index
    %20 = vector.load %arg3[%c16, %c0_10] : memref<432x128xf32, #tpu.memory_space<vmem>>, vector<1x128xf32>
    %c24 = arith.constant 24 : index
    %c0_11 = arith.constant 0 : index
    %21 = vector.load %arg3[%c24, %c0_11] : memref<432x128xf32, #tpu.memory_space<vmem>>, vector<128x128xf32>
    %c152 = arith.constant 152 : index
    %c0_12 = arith.constant 0 : index
    %22 = vector.load %arg3[%c152, %c0_12] : memref<432x128xf32, #tpu.memory_space<vmem>>, vector<1x128xf32>
    %c160 = arith.constant 160 : index
    %c0_13 = arith.constant 0 : index
    %23 = vector.load %arg3[%c160, %c0_13] : memref<432x128xf32, #tpu.memory_space<vmem>>, vector<128x128xf32>
    %c288 = arith.constant 288 : index
    %c0_14 = arith.constant 0 : index
    %24 = vector.load %arg3[%c288, %c0_14] : memref<432x128xf32, #tpu.memory_space<vmem>>, vector<1x128xf32>
    %c296 = arith.constant 296 : index
    %c0_15 = arith.constant 0 : index
    %25 = vector.load %arg3[%c296, %c0_15] : memref<432x128xf32, #tpu.memory_space<vmem>>, vector<128x128xf32>
    %c424 = arith.constant 424 : index
    %c0_16 = arith.constant 0 : index
    %26 = vector.load %arg3[%c424, %c0_16] : memref<432x128xf32, #tpu.memory_space<vmem>>, vector<1x128xf32>
    %cst_17 = arith.constant dense<0.000000e+00> : vector<8x16xf32>
    %27 = tpu.matmul %18, %1, %cst_17 {dimension_numbers = #tpu.dot_dimension_numbers<[1], [0], [0], [1], [0, 0, 1, 1], [], []>} : vector<8x16xf32>, vector<16x16xf32>, vector<8x16xf32> -> vector<8x16xf32>
    %cst_18 = arith.constant dense<0.000000e+00> : vector<8x128xf32>
    %28 = tpu.matmul %27, %19, %cst_18 {dimension_numbers = #tpu.dot_dimension_numbers<[1], [0], [0], [1], [0, 0, 1, 1], [], []>} : vector<8x16xf32>, vector<16x128xf32>, vector<8x128xf32> -> vector<8x128xf32>
    %cst_19 = arith.constant dense<0.000000e+00> : vector<16x128xf32>
    %29 = tpu.matmul %17, %28, %cst_19 {dimension_numbers = #tpu.dot_dimension_numbers<[1], [0], [0], [1], [0, 0, 1, 1], [], []>} : vector<16x8xf32>, vector<8x128xf32>, vector<16x128xf32> -> vector<16x128xf32>
    %30 = vector.broadcast %20 : vector<1x128xf32> to vector<16x128xf32>
    %31 = arith.addf %29, %30 : vector<16x128xf32>
    %cst_20 = arith.constant 0.000000e+00 : f32
    %32 = vector.broadcast %cst_20 : f32 to vector<16x128xf32>
    %33 = arith.maximumf %31, %32 : vector<16x128xf32>
    %cst_21 = arith.constant dense<0.000000e+00> : vector<8x128xf32>
    %34 = tpu.matmul %18, %33, %cst_21 {dimension_numbers = #tpu.dot_dimension_numbers<[1], [0], [0], [1], [0, 0, 1, 1], [], []>} : vector<8x16xf32>, vector<16x128xf32>, vector<8x128xf32> -> vector<8x128xf32>
    %cst_22 = arith.constant dense<0.000000e+00> : vector<8x128xf32>
    %35 = tpu.matmul %34, %21, %cst_22 {dimension_numbers = #tpu.dot_dimension_numbers<[1], [0], [0], [1], [0, 0, 1, 1], [], []>} : vector<8x128xf32>, vector<128x128xf32>, vector<8x128xf32> -> vector<8x128xf32>
    %cst_23 = arith.constant dense<0.000000e+00> : vector<16x128xf32>
    %36 = tpu.matmul %17, %35, %cst_23 {dimension_numbers = #tpu.dot_dimension_numbers<[1], [0], [0], [1], [0, 0, 1, 1], [], []>} : vector<16x8xf32>, vector<8x128xf32>, vector<16x128xf32> -> vector<16x128xf32>
    %37 = vector.broadcast %22 : vector<1x128xf32> to vector<16x128xf32>
    %38 = arith.addf %36, %37 : vector<16x128xf32>
    %cst_24 = arith.constant 0.000000e+00 : f32
    %39 = vector.broadcast %cst_24 : f32 to vector<16x128xf32>
    %40 = arith.maximumf %38, %39 : vector<16x128xf32>
    %cst_25 = arith.constant dense<0.000000e+00> : vector<16x128xf32>
    %41 = tpu.matmul %40, %23, %cst_25 {dimension_numbers = #tpu.dot_dimension_numbers<[1], [0], [0], [1], [0, 0, 1, 1], [], []>} : vector<16x128xf32>, vector<128x128xf32>, vector<16x128xf32> -> vector<16x128xf32>
    %42 = vector.broadcast %24 : vector<1x128xf32> to vector<16x128xf32>
    %43 = arith.addf %41, %42 : vector<16x128xf32>
    %cst_26 = arith.constant 0.000000e+00 : f32
    %44 = vector.broadcast %cst_26 : f32 to vector<16x128xf32>
    %45 = arith.maximumf %43, %44 : vector<16x128xf32>
    %cst_27 = arith.constant dense<0.000000e+00> : vector<16x128xf32>
    %46 = tpu.matmul %45, %25, %cst_27 {dimension_numbers = #tpu.dot_dimension_numbers<[1], [0], [0], [1], [0, 0, 1, 1], [], []>} : vector<16x128xf32>, vector<128x128xf32>, vector<16x128xf32> -> vector<16x128xf32>
    %47 = vector.broadcast %26 : vector<1x128xf32> to vector<16x128xf32>
    %48 = arith.addf %46, %47 : vector<16x128xf32>
    %c0_28 = arith.constant 0 : index
    %c0_29 = arith.constant 0 : index
    %c0_30 = arith.constant 0 : index
    %49 = vector.load %arg4[%c0_28, %c0_29, %c0_30] : memref<1x16x128xf32, #tpu.memory_space<vmem>>, vector<1x16x128xf32>
    %50 = vector.shape_cast %49 : vector<1x16x128xf32> to vector<16x128xf32>
    %51 = vector.shape_cast %48 : vector<16x128xf32> to vector<1x16x128xf32>
    tpu.vector_store %arg4[%c0_28, %c0_29, %c0_30], %51 {strides = array<i32>} : memref<1x16x128xf32, #tpu.memory_space<vmem>>, vector<1x16x128xf32>,
    return
  }
  func.func @transform_0(%arg0: i32) -> (i32, i32, i32) {
    %c0_i32 = arith.constant 0 : i32
    %c0_i32_0 = arith.constant 0 : i32
    %c0_i32_1 = arith.constant 0 : i32
    return %arg0, %c0_i32, %c0_i32_0 : i32, i32, i32
  }
  func.func @transform_1(%arg0: i32) -> (i32, i32, i32) {
    %c0_i32 = arith.constant 0 : i32
    %c0_i32_0 = arith.constant 0 : i32
    %c0_i32_1 = arith.constant 0 : i32
    return %arg0, %c0_i32, %c0_i32_0 : i32, i32, i32
  }
  func.func @transform_2(%arg0: i32) -> (i32, i32) {
    %c0_i32 = arith.constant 0 : i32
    %c0_i32_0 = arith.constant 0 : i32
    %c0_i32_1 = arith.constant 0 : i32
    return %c0_i32, %c0_i32_0 : i32, i32
  }
  func.func @transform_3(%arg0: i32) -> (i32, i32, i32) {
    %c0_i32 = arith.constant 0 : i32
    %c0_i32_0 = arith.constant 0 : i32
    %c0_i32_1 = arith.constant 0 : i32
    return %arg0, %c0_i32, %c0_i32_0 : i32, i32, i32
  }
}

</mosaic_0001>

<llo_original>
// kernel: aal_hgcn_forward.1
$region0: #{aal_hgcn_forward.1}
  #allocation0 [shape = 'u32[]', space=smem, size = 0x4, offset = 0x4, fixed_abs, tag = 'smem constant byte address 0x4 - core index']
  #allocation1 [shape = 'u32[144,128]{1,0:T(1,128)}', space=vmem, size = 0x12000, scoped, tag = 'internal scratch']
  %s0 = inlined_call_operand.vmem [shape: f32[4,16,16], index: 0, kind: input, shape index: {}]
  %s1 = inlined_call_operand.vmem [shape: f32[4,16,8], index: 1, kind: input, shape index: {}]
  %s2 = inlined_call_operand.hbm [shape: f32[432,128], index: 2, kind: input, shape index: {}]
  %s3 = inlined_call_operand.hbm [shape: f32[4,16,128], index: 3, kind: output, shape index: {}]
  %s4 = sld [smem:[#allocation0]]
  $region49: #{aal_hgcn_forward.1} parent=0
    _
  %s6 = ssub.s32 1, %s4
  %s7 = scalar_select 0, %s6, %s4
  $region1: #{aal_hgcn_forward.1} parent=0
    #allocation2 [shape = 'u8[221184]{0}', space=vmem, size = 0x36000, scoped, tag = 'input window, operand 2, single buffered']
    #allocation3 [shape = 's32[2]{0}', space=sflag, size = 0x8, scoped, tag = 'scoped memory for aal_hgcn_forward.1']
    #allocation4 [shape = 's32[2]{0}', space=sflag, size = 0x8, scoped, tag = 'scoped memory for aal_hgcn_forward.1']
    #allocation5 [shape = 'u8[16384]{0}', space=vmem, size = 0x4000, scoped, tag = 'output window, operand 0']
    %8 = vsyncpa [#allocation3], 0
    %9 = vsyncpa [#allocation4], 0
    %s10 = scalar_lea.sflag [#allocation4], 1
    %11 = vsyncpa %s10, 0
    loop: start=0, step=1, limit=6
    $region2: #{aal_hgcn_forward.1} parent=1 // loop_pre_header
      _
    $region3: #{aal_hgcn_forward.1} parent=1 // loop_header
      %s13 = sphi 0, %s17
      %p14 = scmp.ge.s32.totalorder %s13, 6
      %s23 = sphi 0, %s25
      %s26 = sphi 0, %s23
      %s27 = sphi 0, %s26
      %s43 = sphi 0, %s27
      %s49 = sphi 0, %s51
      %s52 = sphi 0, %s49
      %s53 = sphi 0, %s52
      %s69 = sphi 0, %s53
      %s73 = sphi 0, %s73
      %s75 = sphi 0, %s73
      %s76 = sphi 0, %s75
      %s90 = sphi 0, %s76
      %s96 = sphi 0, %s98
      %s99 = sphi 0, %s96
      %s100 = sphi 0, %s99
      %s116 = sphi 0, %s100
    $region4: #{aal_hgcn_forward.1} parent=1 // loop_header_branch
      %16 = sbr.rel (%p14) target = $region8
    $region5: #{aal_hgcn_forward.1} parent=1 // loop_body
      %s18 = ssub.s32 %s13, 1
      %s19 = ssub.s32 %s13, 2
      %s20 = sadd.s32 %s13, 1
      %s21 = ssub.s32 %s13, %s20
      %p22 = scmp.eq.s32.totalorder %s21, 0
      %s24 = sadd.s32 %s23, 1
      %s25 = scalar_select %p22, %s23, %s24
      %p28 = pneg %p22
      %p29 = scmp.eq.s32.totalorder %s13, 3
      %p30 = por %p28, %p29
      %p31 = scmp.ne.s32.totalorder %s23, %s26
      %p32 = scmp.eq.s32.totalorder %s13, 0
      %p33 = por %p31, %p32
      %p34 = scmp.ne.s32.totalorder %s23, %s26
      %p35 = scmp.eq.s32.totalorder %s18, 3
      %p36 = por %p34, %p35
      %p37 = scmp.ne.s32.totalorder %s26, %s27
      %p38 = scmp.eq.s32.totalorder %s18, 0
      %p39 = por %p37, %p38
      %p40 = scmp.ne.s32.totalorder %s26, %s27
      %p41 = scmp.eq.s32.totalorder %s19, 3
      %p42 = por %p40, %p41
      %p44 = scmp.ne.s32.totalorder %s27, %s43
      %p45 = scmp.eq.s32.totalorder %s19, 0
      %p46 = por %p44, %p45
      %s47 = ssub.s32 %s13, %s20
      %p48 = scmp.eq.s32.totalorder %s47, 0
      %s50 = sadd.s32 %s49, 1
      %s51 = scalar_select %p48, %s49, %s50
      %p54 = pneg %p48
      %p55 = scmp.eq.s32.totalorder %s13, 3
      %p56 = por %p54, %p55
      %p57 = scmp.ne.s32.totalorder %s49, %s52
      %p58 = scmp.eq.s32.totalorder %s13, 0
      %p59 = por %p57, %p58
      %p60 = scmp.ne.s32.totalorder %s49, %s52
      %p61 = scmp.eq.s32.totalorder %s18, 3
      %p62 = por %p60, %p61
      %p63 = scmp.ne.s32.totalorder %s52, %s53
      %p64 = scmp.eq.s32.totalorder %s18, 0
      %p65 = por %p63, %p64
      %p66 = scmp.ne.s32.totalorder %s52, %s53
      %p67 = scmp.eq.s32.totalorder %s19, 3
      %p68 = por %p66, %p67
      %p70 = scmp.ne.s32.totalorder %s53, %s69
      %p71 = scmp.eq.s32.totalorder %s19, 0
      %p72 = por %p70, %p71
      %s74 = sadd.s32 %s73, 1
      %p77 = scmp.eq.s32.totalorder %s13, 3
      %p78 = scmp.ne.s32.totalorder %s73, %s75
      %p79 = scmp.eq.s32.totalorder %s13, 0
      %p80 = por %p78, %p79
      %p81 = scmp.ne.s32.totalorder %s73, %s75
      %p82 = scmp.eq.s32.totalorder %s18, 3
      %p83 = por %p81, %p82
      %p84 = scmp.ne.s32.totalorder %s75, %s76
      %p85 = scmp.eq.s32.totalorder %s18, 0
      %p86 = por %p84, %p85
      %p87 = scmp.ne.s32.totalorder %s75, %s76
      %p88 = scmp.eq.s32.totalorder %s19, 3
      %p89 = por %p87, %p88
      %p91 = scmp.ne.s32.totalorder %s76, %s90
      %p92 = scmp.eq.s32.totalorder %s19, 0
      %p93 = por %p91, %p92
      %s94 = ssub.s32 %s13, %s20
      %p95 = scmp.eq.s32.totalorder %s94, 0
      %s97 = sadd.s32 %s96, 1
      %s98 = scalar_select %p95, %s96, %s97
      %p101 = pneg %p95
      %p102 = scmp.eq.s32.totalorder %s13, 3
      %p103 = por %p101, %p102
      %p104 = scmp.ne.s32.totalorder %s96, %s99
      %p105 = scmp.eq.s32.totalorder %s13, 0
      %p106 = por %p104, %p105
      %p107 = scmp.ne.s32.totalorder %s96, %s99
      %p108 = scmp.eq.s32.totalorder %s18, 3
      %p109 = por %p107, %p108
      %p110 = scmp.ne.s32.totalorder %s99, %s100
      %p111 = scmp.eq.s32.totalorder %s18, 0
      %p112 = por %p110, %p111
      %p113 = scmp.ne.s32.totalorder %s99, %s100
      %p114 = scmp.eq.s32.totalorder %s19, 3
      %p115 = por %p113, %p114
      %p117 = scmp.ne.s32.totalorder %s100, %s116
      %p118 = scmp.eq.s32.totalorder %s19, 0
      %p119 = por %p117, %p118
      %p120 = scmp.le.s32.totalorder 1, %s13
      %p121 = scmp.lt.s32.totalorder %s13, 5
      %p122 = pnand %p120, %p121
      %p123 = pneg %p122
      // Predicated region
      $region9: #{aal_hgcn_forward.1} parent=5 // pred_check
        _
      $region10: #{aal_hgcn_forward.1} parent=5 // pred_check_branch
        %125 = sbr.rel (%p122) target = $region12
      $region11: #{aal_hgcn_forward.1} parent=5 // pred_region
        %s126 = ssub.s32 %s13, 1
        // Predicated region
        $region13: #{aal_hgcn_forward.1} parent=11 // pred_check
          %p127 = pneg %p86
        $region14: #{aal_hgcn_forward.1} parent=11 // pred_check_branch
          %129 = sbr.rel (%p127) target = $region16
        $region15: #{aal_hgcn_forward.1} parent=11 // pred_region
          %s131 = ssub.s32 6912, 6912
          %132 = vsyncadd [#allocation3], %s131
          %s133 = sshll.u32 [#allocation2], 4
          %s134 = int_to_ptr.vmem [resolvable:$true] %s133
          %139 = dma.hbm_to_vmem [thread:$0]  %s2, 6912, %s134, [#allocation3], 128, 128, 8
        $region16: #{aal_hgcn_forward.1} parent=11 // pred_fallthru
          _
      $region12: #{aal_hgcn_forward.1} parent=5 // pred_fallthru
        _
      %p140 = scmp.lt.s32.totalorder %s13, 4
      // Predicated region
      $region17: #{aal_hgcn_forward.1} parent=5 // pred_check
        %p141 = pneg %p140
      $region18: #{aal_hgcn_forward.1} parent=5 // pred_check_branch
        %143 = sbr.rel (%p141) target = $region20
      $region19: #{aal_hgcn_forward.1} parent=5 // pred_region
        // Predicated region
        $region21: #{aal_hgcn_forward.1} parent=19 // pred_check
          %p144 = pneg %p33
        $region22: #{aal_hgcn_forward.1} parent=19 // pred_check_branch
          %146 = sbr.rel (%p144) target = $region24
        $region23: #{aal_hgcn_forward.1} parent=19 // pred_region
          %p147 = scmp.lt.s32.totalorder %s13, 3
          %s148 = scalar_select %p147, %s13, 3
          %s149 = smul.addr %s148, 2
          %s150 = smul.addr %s149, 8
          %s151 = scalar_lea.vmem %s0, %s150
        $region24: #{aal_hgcn_forward.1} parent=19 // pred_fallthru
          _
        // Predicated region
        $region25: #{aal_hgcn_forward.1} parent=19 // pred_check
          %p152 = pneg %p59
        $region26: #{aal_hgcn_forward.1} parent=19 // pred_check_branch
          %154 = sbr.rel (%p152) target = $region28
        $region27: #{aal_hgcn_forward.1} parent=19 // pred_region
          %p155 = scmp.lt.s32.totalorder %s13, 3
          %s156 = scalar_select %p155, %s13, 3
          %s157 = smul.addr %s156, 2
          %s158 = smul.addr %s157, 8
          %s159 = scalar_lea.vmem %s1, %s158
        $region28: #{aal_hgcn_forward.1} parent=19 // pred_fallthru
          _
      $region20: #{aal_hgcn_forward.1} parent=5 // pred_fallthru
        _
      %p160 = scmp.le.s32.totalorder 1, %s13
      %p161 = scmp.lt.s32.totalorder %s13, 5
      %p162 = pnand %p160, %p161
      %p163 = pneg %p162
      // Predicated region
      $region29: #{aal_hgcn_forward.1} parent=5 // pred_check
        _
      $region30: #{aal_hgcn_forward.1} parent=5 // pred_check_branch
        %165 = sbr.rel (%p162) target = $region32
      $region31: #{aal_hgcn_forward.1} parent=5 // pred_region
        %s166 = ssub.s32 %s13, 1
        // Predicated region
        $region33: #{aal_hgcn_forward.1} parent=31 // pred_check
          %p167 = pneg %p86
        $region34: #{aal_hgcn_forward.1} parent=31 // pred_check_branch
          %169 = sbr.rel (%p167) target = $region36
        $region35: #{aal_hgcn_forward.1} parent=31 // pred_region
          %170 = dma.done [#allocation3], 6912
        $region36: #{aal_hgcn_forward.1} parent=31 // pred_fallthru
          _
        %p171 = scmp.lt.s32.totalorder %s18, 3
        %s172 = scalar_select %p171, %s18, 3
        %s173 = smul.addr %s172, 2
        %s174 = smul.addr %s173, 8
        %s175 = scalar_lea.vmem %s0, %s174
        %p176 = pneg %p39
        %p177 = pneg %p36
        %p178 = scmp.lt.s32.totalorder %s18, 3
        %s179 = scalar_select %p178, %s18, 3
        %s180 = smul.addr %s179, 2
        %s181 = smul.addr %s180, 8
        %s182 = scalar_lea.vmem %s1, %s181
        %p183 = pneg %p65
        %p184 = pneg %p62
        %p185 = pneg %p86
        %p186 = pneg %p83
        %p187 = pneg %p112
        %p188 = pneg %p109
        %s189 = sand.u32 %s99, 1
        %s190 = scalar_lea.sflag [#allocation4], %s189
        %s191 = sand.u32 %s99, 1
        %s192 = smul.addr %s191, 16
        %s193 = scalar_lea.vmem [#allocation5], %s192
        %p194 = scmp.lt.s32.totalorder %s18, 3
        %s195 = scalar_select %p194, %s18, 3
        %s196 = smul.addr %s195, 2
        %s197 = smul.addr %s196, 8
        %s198 = scalar_lea.vmem %s0, %s197
        %p199 = scmp.lt.s32.totalorder %s18, 3
        %s200 = scalar_select %p199, %s18, 3
        %s201 = smul.addr %s200, 2
        %s202 = smul.addr %s201, 8
        %s203 = scalar_lea.vmem %s1, %s202
        %v204 = vld [vmem:[%s198] sm:$0xff]
        %v205 = vld [vmem:[%s198 + $0x8] sm:$0xff]
        %v206 = vld [vmem:[%s203] sm:$0xff]
        %v207 = vld [vmem:[%s203 + $0x8] sm:$0xff]
        %vm208 = vcmask 64512
        %v209 = vsel %vm208, %v206, 0.0
        %210 = vadd.xlane.f32.xlu0 %v209
        %v211 = vpop.xlane.xlu0 %210
        %v212 = vsel %vm208, %v207, 0.0
        %213 = vadd.xlane.f32.xlu0 %v212
        %v214 = vpop.xlane.xlu0 %213
        %v215 = vadd.f32 %v209, %v212
        %v216 = vrot.slane %v215, 4
        %v217 = vadd.f32 %v215, %v216
        %v218 = vrot.slane %v217, 2
        %v219 = vadd.f32 %v217, %v218
        %v220 = vrot.slane %v219, 1
        %v221 = vadd.f32 %v219, %v220
        %v222 = vadd.f32 %v211, 1e-05
        %v223 = vadd.f32 %v214, 1e-05
        %v224 = vrsqrt.pop %v222
        %v225 = vrsqrt.pop %v223
        %v226 = vadd.f32 %v221, 1e-05
        %v227 = vrcp.pop %v226
        %v228 = vmul.f32 %v224, %v206
        %v229 = vmul.f32 %v225, %v207
        %v230 = vmul.f32 %v228, %v227
        %v231 = vmul.f32 %v229, %v227
        %232 = vxpose.xlu0.b32.start [1/16] %v228, 128
        %233 = vxpose.xlu0.b32.cont [2/16] %v229, 128
        %234 = vxpose.xlu0.b32.cont [3/16] 0.0, 128
        %235 = vxpose.xlu0.b32.cont [4/16] 0.0, 128
        %236 = vxpose.xlu0.b32.cont [5/16] 0.0, 128
        %237 = vxpose.xlu0.b32.cont [6/16] 0.0, 128
        %238 = vxpose.xlu0.b32.cont [7/16] 0.0, 128
        %239 = vxpose.xlu0.b32.cont [8/16] 0.0, 128
        %240 = vxpose.xlu0.b32.cont [9/16] 0.0, 128
        %241 = vxpose.xlu0.b32.cont [10/16] 0.0, 128
        %242 = vxpose.xlu0.b32.cont [11/16] 0.0, 128
        %243 = vxpose.xlu0.b32.cont [12/16] 0.0, 128
        %244 = vxpose.xlu0.b32.cont [13/16] 0.0, 128
        %245 = vxpose.xlu0.b32.cont [14/16] 0.0, 128
        %246 = vxpose.xlu0.b32.cont [15/16] 0.0, 128
        %247 = vxpose.xlu0.b32.end [16/16] 0.0, 128
        %v248 = vpop.trf.xlu0
        %v249 = vpop.trf.xlu0
        %v250 = vpop.trf.xlu0
        %v251 = vpop.trf.xlu0
        %v252 = vpop.trf.xlu0
        %v253 = vpop.trf.xlu0
        %v254 = vpop.trf.xlu0
        %v255 = vpop.trf.xlu0
        %v256 = vpop.trf.xlu0
        %v257 = vpop.trf.xlu0
        %v258 = vpop.trf.xlu0
        %v259 = vpop.trf.xlu0
        %v260 = vpop.trf.xlu0
        %v261 = vpop.trf.xlu0
        %v262 = vpop.trf.xlu0
        %v263 = vpop.trf.xlu0
        %v264 = vld [vmem:[#allocation2] sm:$0xff]
        %v265 = vld [vmem:[#allocation2 + $0x8] sm:$0xff]
        %v266 = vld [vmem:[#allocation2 + $0x10] sm:$0x1]
        %v267 = vld [vmem:[#allocation2 + $0x18] sm:$0xff]
        %v268 = vld [vmem:[#allocation2 + $0x20] sm:$0xff]
        %v269 = vld [vmem:[#allocation2 + $0x28] sm:$0xff]
        %v270 = vld [vmem:[#allocation2 + $0x30] sm:$0xff]
        %v271 = vld [vmem:[#allocation2 + $0x38] sm:$0xff]
        %v272 = vld [vmem:[#allocation2 + $0x40] sm:$0xff]
        %v273 = vld [vmem:[#allocation2 + $0x48] sm:$0xff]
        %v274 = vld [vmem:[#allocation2 + $0x50] sm:$0xff]
        %v275 = vld [vmem:[#allocation2 + $0x58] sm:$0xff]
        %v276 = vld [vmem:[#allocation2 + $0x60] sm:$0xff]
        %v277 = vld [vmem:[#allocation2 + $0x68] sm:$0xff]
        %v278 = vld [vmem:[#allocation2 + $0x70] sm:$0xff]
        %v279 = vld [vmem:[#allocation2 + $0x78] sm:$0xff]
        %v280 = vld [vmem:[#allocation2 + $0x80] sm:$0xff]
        %v281 = vld [vmem:[#allocation2 + $0x88] sm:$0xff]
        %v282 = vld [vmem:[#allocation2 + $0x90] sm:$0xff]
        %v283 = vld [vmem:[#allocation2 + $0x98] sm:$0x1]
        %v284 = vld [vmem:[#allocation2 + $0xa0] sm:$0xff]
        %v285 = vld [vmem:[#allocation2 + $0xa8] sm:$0xff]
        %v286 = vld [vmem:[#allocation2 + $0xb0] sm:$0xff]
        %v287 = vld [vmem:[#allocation2 + $0xb8] sm:$0xff]
        %v288 = vld [vmem:[#allocation2 + $0xc0] sm:$0xff]
        %v289 = vld [vmem:[#allocation2 + $0xc8] sm:$0xff]
        %v290 = vld [vmem:[#allocation2 + $0xd0] sm:$0xff]
        %v291 = vld [vmem:[#allocation2 + $0xd8] sm:$0xff]
        %v292 = vld [vmem:[#allocation2 + $0xe0] sm:$0xff]
        %v293 = vld [vmem:[#allocation2 + $0xe8] sm:$0xff]
        %v294 = vld [vmem:[#allocation2 + $0xf0] sm:$0xff]
        %v295 = vld [vmem:[#allocation2 + $0xf8] sm:$0xff]
        %v296 = vld [vmem:[#allocation2 + $0x100] sm:$0xff]
        %v297 = vld [vmem:[#allocation2 + $0x108] sm:$0xff]
        %v298 = vld [vmem:[#allocation2 + $0x110] sm:$0xff]
        %v299 = vld [vmem:[#allocation2 + $0x118] sm:$0xff]
        %v300 = vld [vmem:[#allocation2 + $0x120] sm:$0x1]
        %v301 = vld [vmem:[#allocation2 + $0x128] sm:$0xff]
        %v302 = vld [vmem:[#allocation2 + $0x130] sm:$0xff]
        %v303 = vld [vmem:[#allocation2 + $0x138] sm:$0xff]
        %v304 = vld [vmem:[#allocation2 + $0x140] sm:$0xff]
        %v305 = vld [vmem:[#allocation2 + $0x148] sm:$0xff]
        %v306 = vld [vmem:[#allocation2 + $0x150] sm:$0xff]
        %v307 = vld [vmem:[#allocation2 + $0x158] sm:$0xff]
        %v308 = vld [vmem:[#allocation2 + $0x160] sm:$0xff]
        %v309 = vld [vmem:[#allocation2 + $0x168] sm:$0xff]
        %v310 = vld [vmem:[#allocation2 + $0x170] sm:$0xff]
        %v311 = vld [vmem:[#allocation2 + $0x178] sm:$0xff]
        %v312 = vld [vmem:[#allocation2 + $0x180] sm:$0xff]
        %v313 = vld [vmem:[#allocation2 + $0x188] sm:$0xff]
        %v314 = vld [vmem:[#allocation2 + $0x190] sm:$0xff]
        %v315 = vld [vmem:[#allocation2 + $0x198] sm:$0xff]
        %v316 = vld [vmem:[#allocation2 + $0x1a0] sm:$0xff]
        %v317 = vld [vmem:[#allocation2 + $0x1a8] sm:$0x1]
        %vm318 = vcmask 130048
        %v320 = vsel %vm318, %v248, 0
        %322 = vmatprep.subr.mxu0 0.0
        %323 = vmatpush1.msra.mxu0 0.0
        %324 = vmatprep.subr.mxu0 0.0
        %325 = vmatpush1.msra.mxu0 0.0
        %326 = vmatprep.subr.mxu0 0.0
        %327 = vmatpush1.msra.mxu0 0.0
        %328 = vmatprep.subr.mxu0 0.0
        %329 = vmatpush1.msra.mxu0 0.0
        %330 = vmatprep.subr.mxu0 0.0
        %331 = vmatpush1.msra.mxu0 0.0
        %332 = vmatprep.subr.mxu0 0.0
        %333 = vmatpush1.msra.mxu0 0.0
        %334 = vmatprep.subr.mxu0 0.0
        %335 = vmatpush1.msra.mxu0 0.0
        %336 = vmatprep.subr.mxu0 0.0
        %337 = vmatpush1.msra.mxu0 0.0
        %338 = vmatprep.subr.mxu0 0.0
        %339 = vmatpush1.msra.mxu0 0.0
        %340 = vmatprep.subr.mxu0 0.0
        %341 = vmatpush1.msra.mxu0 0.0
        %342 = vmatprep.subr.mxu0 0.0
        %343 = vmatpush1.msra.mxu0 0.0
        %344 = vmatprep.subr.mxu0 0.0
        %345 = vmatpush1.msra.mxu0 0.0
        %346 = vmatprep.subr.mxu0 0.0
        %347 = vmatpush1.msra.mxu0 0.0
        %348 = vmatprep.subr.mxu0 0.0
        %349 = vmatpush1.msra.mxu0 0.0
        %350 = vmatprep.subr.mxu0 0.0
        %351 = vmatpush1.msra.mxu0 %v205
        %352 = vmatprep.subr.mxu0 0.0
        %353 = vmatpush1.msra.mxu0 %v204
        %354 = vmatprep.subr.mxu0 0.0
        %355 = vmatpush2.msra.mxu0 0.0
        %356 = vmatprep.subr.mxu0 0.0
        %357 = vmatpush2.msra.mxu0 0.0
        %358 = vmatprep.subr.mxu0 0.0
        %359 = vmatpush2.msra.mxu0 0.0
        %360 = vmatprep.subr.mxu0 0.0
        %361 = vmatpush2.msra.mxu0 0.0
        %362 = vmatprep.subr.mxu0 0.0
        %363 = vmatpush2.msra.mxu0 0.0
        %364 = vmatprep.subr.mxu0 0.0
        %365 = vmatpush2.msra.mxu0 0.0
        %366 = vmatprep.subr.mxu0 0.0
        %367 = vmatpush2.msra.mxu0 0.0
        %368 = vmatprep.subr.mxu0 0.0
        %369 = vmatpush2.msra.mxu0 0.0
        %370 = vmatprep.subr.mxu0 0.0
        %371 = vmatpush2.msra.mxu0 0.0
        %372 = vmatprep.subr.mxu0 0.0
        %373 = vmatpush2.msra.mxu0 0.0
        %374 = vmatprep.subr.mxu0 0.0
        %375 = vmatpush2.msra.mxu0 0.0
        %376 = vmatprep.subr.mxu0 0.0
        %377 = vmatpush2.msra.mxu0 0.0
        %378 = vmatprep.subr.mxu0 0.0
        %379 = vmatpush2.msra.mxu0 0.0
        %380 = vmatprep.subr.mxu0 0.0
        %381 = vmatpush2.msra.mxu0 0.0
        %382 = vmatprep.subr.mxu0 0.0
        %383 = vmatpush2.msra.mxu0 0.0
        %384 = vmatprep.subr.mxu0 0.0
        %385 = vmatpush2.msra.mxu0 0.0
        %386 = vmatprep.mubr.f32.mxu0 0.0
        %387 = vmatmul.mubr.f32.gmra.mxu0 %v320
        %v388 = vpop.f32.mrf.mxu0
        %v389 = vadd.f32 0.0, %v388
        %v390 = vpop.f32.mrf.mxu0
        %391 = vdwg.mxu0
        %v393 = vsel %vm318, %v389, 0
        %395 = vmatprep.subr.mxu0 0.0
        %396 = vmatpush1.msra.mxu0 0.0
        %397 = vmatprep.subr.mxu0 0.0
        %398 = vmatpush1.msra.mxu0 0.0
        %399 = vmatprep.subr.mxu0 0.0
        %400 = vmatpush1.msra.mxu0 0.0
        %401 = vmatprep.subr.mxu0 0.0
        %402 = vmatpush1.msra.mxu0 0.0
        %403 = vmatprep.subr.mxu0 0.0
        %404 = vmatpush1.msra.mxu0 0.0
        %405 = vmatprep.subr.mxu0 0.0
        %406 = vmatpush1.msra.mxu0 0.0
        %407 = vmatprep.subr.mxu0 0.0
        %408 = vmatpush1.msra.mxu0 0.0
        %409 = vmatprep.subr.mxu0 0.0
        %410 = vmatpush1.msra.mxu0 0.0
        %411 = vmatprep.subr.mxu0 0.0
        %412 = vmatpush1.msra.mxu0 0.0
        %413 = vmatprep.subr.mxu0 0.0
        %414 = vmatpush1.msra.mxu0 0.0
        %415 = vmatprep.subr.mxu0 0.0
        %416 = vmatpush1.msra.mxu0 0.0
        %417 = vmatprep.subr.mxu0 0.0
        %418 = vmatpush1.msra.mxu0 0.0
        %419 = vmatprep.subr.mxu0 0.0
        %420 = vmatpush1.msra.mxu0 0.0
        %421 = vmatprep.subr.mxu0 0.0
        %422 = vmatpush1.msra.mxu0 0.0
        %423 = vmatprep.subr.mxu0 0.0
        %424 = vmatpush1.msra.mxu0 %v265
        %425 = vmatprep.subr.mxu0 0.0
        %426 = vmatpush1.msra.mxu0 %v264
        %427 = vmatprep.subr.mxu0 0.0
        %428 = vmatpush2.msra.mxu0 0.0
        %429 = vmatprep.subr.mxu0 0.0
        %430 = vmatpush2.msra.mxu0 0.0
        %431 = vmatprep.subr.mxu0 0.0
        %432 = vmatpush2.msra.mxu0 0.0
        %433 = vmatprep.subr.mxu0 0.0
        %434 = vmatpush2.msra.mxu0 0.0
        %435 = vmatprep.subr.mxu0 0.0
        %436 = vmatpush2.msra.mxu0 0.0
        %437 = vmatprep.subr.mxu0 0.0
        %438 = vmatpush2.msra.mxu0 0.0
        %439 = vmatprep.subr.mxu0 0.0
        %440 = vmatpush2.msra.mxu0 0.0
        %441 = vmatprep.subr.mxu0 0.0
        %442 = vmatpush2.msra.mxu0 0.0
        %443 = vmatprep.subr.mxu0 0.0
        %444 = vmatpush2.msra.mxu0 0.0
        %445 = vmatprep.subr.mxu0 0.0
        %446 = vmatpush2.msra.mxu0 0.0
        %447 = vmatprep.subr.mxu0 0.0
        %448 = vmatpush2.msra.mxu0 0.0
        %449 = vmatprep.subr.mxu0 0.0
        %450 = vmatpush2.msra.mxu0 0.0
        %451 = vmatprep.subr.mxu0 0.0
        %452 = vmatpush2.msra.mxu0 0.0
        %453 = vmatprep.subr.mxu0 0.0
        %454 = vmatpush2.msra.mxu0 0.0
        %455 = vmatprep.subr.mxu0 0.0
        %456 = vmatpush2.msra.mxu0 0.0
        %457 = vmatprep.subr.mxu0 0.0
        %458 = vmatpush2.msra.mxu0 0.0
        %459 = vmatprep.mubr.f32.mxu0 0.0
        %460 = vmatmul.mubr.f32.gmra.mxu0 %v393
        %v461 = vpop.f32.mrf.mxu0
        %v462 = vadd.f32 0.0, %v461
        %v463 = vpop.f32.mrf.mxu0
        %464 = vdwg.mxu0
        %v465 = vlaneseq
        %v466 = vshrl.u32 %v465, 7
        %v467 = vsub.s32 0, %v466
        %v468 = vrot.slane %v266, %v467
        %v470 = vsel %vm208, %v230, 0
        %v473 = vsel %vm208, %v231, 0
        %475 = vmatprep.subr.mxu0 0.0
        %476 = vmatpush1.msra.mxu0 0.0
        %477 = vmatprep.subr.mxu0 0.0
        %478 = vmatpush1.msra.mxu0 0.0
        %479 = vmatprep.subr.mxu0 0.0
        %480 = vmatpush1.msra.mxu0 0.0
        %481 = vmatprep.subr.mxu0 0.0
        %482 = vmatpush1.msra.mxu0 0.0
        %483 = vmatprep.subr.mxu0 0.0
        %484 = vmatpush1.msra.mxu0 0.0
        %485 = vmatprep.subr.mxu0 0.0
        %486 = vmatpush1.msra.mxu0 0.0
        %487 = vmatprep.subr.mxu0 0.0
        %488 = vmatpush1.msra.mxu0 0.0
        %489 = vmatprep.subr.mxu0 0.0
        %490 = vmatpush1.msra.mxu0 0.0
        %491 = vmatprep.subr.mxu0 0.0
        %492 = vmatpush1.msra.mxu0 0.0
        %493 = vmatprep.subr.mxu0 0.0
        %494 = vmatpush1.msra.mxu0 0.0
        %495 = vmatprep.subr.mxu0 0.0
        %496 = vmatpush1.msra.mxu0 0.0
        %497 = vmatprep.subr.mxu0 0.0
        %498 = vmatpush1.msra.mxu0 0.0
        %499 = vmatprep.subr.mxu0 0.0
        %500 = vmatpush1.msra.mxu0 0.0
        %501 = vmatprep.subr.mxu0 0.0
        %502 = vmatpush1.msra.mxu0 0.0
        %503 = vmatprep.subr.mxu0 0.0
        %504 = vmatpush1.msra.mxu0 0.0
        %505 = vmatprep.subr.mxu0 0.0
        %506 = vmatpush1.msra.mxu0 %v462
        %507 = vmatprep.subr.mxu0 0.0
        %508 = vmatpush2.msra.mxu0 0.0
        %509 = vmatprep.subr.mxu0 0.0
        %510 = vmatpush2.msra.mxu0 0.0
        %511 = vmatprep.subr.mxu0 0.0
        %512 = vmatpush2.msra.mxu0 0.0
        %513 = vmatprep.subr.mxu0 0.0
        %514 = vmatpush2.msra.mxu0 0.0
        %515 = vmatprep.subr.mxu0 0.0
        %516 = vmatpush2.msra.mxu0 0.0
        %517 = vmatprep.subr.mxu0 0.0
        %518 = vmatpush2.msra.mxu0 0.0
        %519 = vmatprep.subr.mxu0 0.0
        %520 = vmatpush2.msra.mxu0 0.0
        %521 = vmatprep.subr.mxu0 0.0
        %522 = vmatpush2.msra.mxu0 0.0
        %523 = vmatprep.subr.mxu0 0.0
        %524 = vmatpush2.msra.mxu0 0.0
        %525 = vmatprep.subr.mxu0 0.0
        %526 = vmatpush2.msra.mxu0 0.0
        %527 = vmatprep.subr.mxu0 0.0
        %528 = vmatpush2.msra.mxu0 0.0
        %529 = vmatprep.subr.mxu0 0.0
        %530 = vmatpush2.msra.mxu0 0.0
        %531 = vmatprep.subr.mxu0 0.0
        %532 = vmatpush2.msra.mxu0 0.0
        %533 = vmatprep.subr.mxu0 0.0
        %534 = vmatpush2.msra.mxu0 0.0
        %535 = vmatprep.subr.mxu0 0.0
        %536 = vmatpush2.msra.mxu0 0.0
        %537 = vmatprep.subr.mxu0 0.0
        %538 = vmatpush2.msra.mxu0 0.0
        %539 = vmatprep.mubr.f32.mxu0 0.0
        %540 = vmatmul.mubr.f32.gmra.mxu0 %v470
        %v541 = vpop.f32.mrf.mxu0
        %v542 = vadd.f32 %v468, %v541
        %v543 = vpop.f32.mrf.mxu0
        %544 = vmatprep.mubr.f32.mxu0 0.0
        %545 = vmatmul.mubr.f32.gmra.mxu0 %v473
        %v546 = vpop.f32.mrf.mxu0
        %v547 = vadd.f32 %v468, %v546
        %v548 = vpop.f32.mrf.mxu0
        %549 = vdwg.mxu0
        %v550 = vmax.f32 %v542, 0.0
        %v551 = vmax.f32 %v547, 0.0
        %552 = vmatprep.subr.mxu0 0.0
        %553 = vmatpush1.msra.mxu0 0.0
        %554 = vmatprep.subr.mxu0 0.0
        %555 = vmatpush1.msra.mxu0 0.0
        %556 = vmatprep.subr.mxu0 0.0
        %557 = vmatpush1.msra.mxu0 0.0
        %558 = vmatprep.subr.mxu0 0.0
        %559 = vmatpush1.msra.mxu0 0.0
        %560 = vmatprep.subr.mxu0 0.0
        %561 = vmatpush1.msra.mxu0 0.0
        %562 = vmatprep.subr.mxu0 0.0
        %563 = vmatpush1.msra.mxu0 0.0
        %564 = vmatprep.subr.mxu0 0.0
        %565 = vmatpush1.msra.mxu0 0.0
        %566 = vmatprep.subr.mxu0 0.0
        %567 = vmatpush1.msra.mxu0 0.0
        %568 = vmatprep.subr.mxu0 0.0
        %569 = vmatpush1.msra.mxu0 0.0
        %570 = vmatprep.subr.mxu0 0.0
        %571 = vmatpush1.msra.mxu0 0.0
        %572 = vmatprep.subr.mxu0 0.0
        %573 = vmatpush1.msra.mxu0 0.0
        %574 = vmatprep.subr.mxu0 0.0
        %575 = vmatpush1.msra.mxu0 0.0
        %576 = vmatprep.subr.mxu0 0.0
        %577 = vmatpush1.msra.mxu0 0.0
        %578 = vmatprep.subr.mxu0 0.0
        %579 = vmatpush1.msra.mxu0 0.0
        %580 = vmatprep.subr.mxu0 0.0
        %581 = vmatpush1.msra.mxu0 %v551
        %582 = vmatprep.subr.mxu0 0.0
        %583 = vmatpush1.msra.mxu0 %v550
        %584 = vmatprep.subr.mxu0 0.0
        %585 = vmatpush2.msra.mxu0 0.0
        %586 = vmatprep.subr.mxu0 0.0
        %587 = vmatpush2.msra.mxu0 0.0
        %588 = vmatprep.subr.mxu0 0.0
        %589 = vmatpush2.msra.mxu0 0.0
        %590 = vmatprep.subr.mxu0 0.0
        %591 = vmatpush2.msra.mxu0 0.0
        %592 = vmatprep.subr.mxu0 0.0
        %593 = vmatpush2.msra.mxu0 0.0
        %594 = vmatprep.subr.mxu0 0.0
        %595 = vmatpush2.msra.mxu0 0.0
        %596 = vmatprep.subr.mxu0 0.0
        %597 = vmatpush2.msra.mxu0 0.0
        %598 = vmatprep.subr.mxu0 0.0
        %599 = vmatpush2.msra.mxu0 0.0
        %600 = vmatprep.subr.mxu0 0.0
        %601 = vmatpush2.msra.mxu0 0.0
        %602 = vmatprep.subr.mxu0 0.0
        %603 = vmatpush2.msra.mxu0 0.0
        %604 = vmatprep.subr.mxu0 0.0
        %605 = vmatpush2.msra.mxu0 0.0
        %606 = vmatprep.subr.mxu0 0.0
        %607 = vmatpush2.msra.mxu0 0.0
        %608 = vmatprep.subr.mxu0 0.0
        %609 = vmatpush2.msra.mxu0 0.0
        %610 = vmatprep.subr.mxu0 0.0
        %611 = vmatpush2.msra.mxu0 0.0
        %612 = vmatprep.subr.mxu0 0.0
        %613 = vmatpush2.msra.mxu0 0.0
        %614 = vmatprep.subr.mxu0 0.0
        %615 = vmatpush2.msra.mxu0 0.0
        %616 = vmatprep.mubr.f32.mxu0 0.0
        %617 = vmatmul.mubr.f32.gmra.mxu0 %v320
        %v618 = vpop.f32.mrf.mxu0
        %v619 = vadd.f32 0.0, %v618
        %v620 = vpop.f32.mrf.mxu0
        %621 = vdwg.mxu0
        %622 = vmatprep.subr.mxu0 0.0
        %623 = vmatpush1.msra.mxu0 %v282
        %624 = vmatprep.subr.mxu0 0.0
        %625 = vmatpush1.msra.mxu0 %v281
        %626 = vmatprep.subr.mxu0 0.0
        %627 = vmatpush1.msra.mxu0 %v280
        %628 = vmatprep.subr.mxu0 0.0
        %629 = vmatpush1.msra.mxu0 %v279
        %630 = vmatprep.subr.mxu0 0.0
        %631 = vmatpush1.msra.mxu0 %v278
        %632 = vmatprep.subr.mxu0 0.0
        %633 = vmatpush1.msra.mxu0 %v277
        %634 = vmatprep.subr.mxu0 0.0
        %635 = vmatpush1.msra.mxu0 %v276
        %636 = vmatprep.subr.mxu0 0.0
        %637 = vmatpush1.msra.mxu0 %v275
        %638 = vmatprep.subr.mxu0 0.0
        %639 = vmatpush1.msra.mxu0 %v274
        %640 = vmatprep.subr.mxu0 0.0
        %641 = vmatpush1.msra.mxu0 %v273
        %642 = vmatprep.subr.mxu0 0.0
        %643 = vmatpush1.msra.mxu0 %v272
        %644 = vmatprep.subr.mxu0 0.0
        %645 = vmatpush1.msra.mxu0 %v271
        %646 = vmatprep.subr.mxu0 0.0
        %647 = vmatpush1.msra.mxu0 %v270
        %648 = vmatprep.subr.mxu0 0.0
        %649 = vmatpush1.msra.mxu0 %v269
        %650 = vmatprep.subr.mxu0 0.0
        %651 = vmatpush1.msra.mxu0 %v268
        %652 = vmatprep.subr.mxu0 0.0
        %653 = vmatpush1.msra.mxu0 %v267
        %654 = vmatprep.subr.mxu0 0.0
        %655 = vmatpush2.msra.mxu0 0.0
        %656 = vmatprep.subr.mxu0 0.0
        %657 = vmatpush2.msra.mxu0 0.0
        %658 = vmatprep.subr.mxu0 0.0
        %659 = vmatpush2.msra.mxu0 0.0
        %660 = vmatprep.subr.mxu0 0.0
        %661 = vmatpush2.msra.mxu0 0.0
        %662 = vmatprep.subr.mxu0 0.0
        %663 = vmatpush2.msra.mxu0 0.0
        %664 = vmatprep.subr.mxu0 0.0
        %665 = vmatpush2.msra.mxu0 0.0
        %666 = vmatprep.subr.mxu0 0.0
        %667 = vmatpush2.msra.mxu0 0.0
        %668 = vmatprep.subr.mxu0 0.0
        %669 = vmatpush2.msra.mxu0 0.0
        %670 = vmatprep.subr.mxu0 0.0
        %671 = vmatpush2.msra.mxu0 0.0
        %672 = vmatprep.subr.mxu0 0.0
        %673 = vmatpush2.msra.mxu0 0.0
        %674 = vmatprep.subr.mxu0 0.0
        %675 = vmatpush2.msra.mxu0 0.0
        %676 = vmatprep.subr.mxu0 0.0
        %677 = vmatpush2.msra.mxu0 0.0
        %678 = vmatprep.subr.mxu0 0.0
        %679 = vmatpush2.msra.mxu0 0.0
        %680 = vmatprep.subr.mxu0 0.0
        %681 = vmatpush2.msra.mxu0 0.0
        %682 = vmatprep.subr.mxu0 0.0
        %683 = vmatpush2.msra.mxu0 0.0
        %684 = vmatprep.subr.mxu0 0.0
        %685 = vmatpush2.msra.mxu0 0.0
        %686 = vmatprep.mubr.f32.mxu0 0.0
        %687 = vmatmul.mubr.f32.gmra.mxu0 %v619
        %v688 = vpop.f32.mrf.mxu0
        %v689 = vadd.f32 0.0, %v688
        %v690 = vpop.f32.mrf.mxu0
        %691 = vdwg.mxu0
        %v692 = vlaneseq
        %v693 = vshrl.u32 %v692, 7
        %v694 = vsub.s32 0, %v693
        %v695 = vrot.slane %v283, %v694
        %696 = vmatprep.subr.mxu0 0.0
        %697 = vmatpush1.msra.mxu0 0.0
        %698 = vmatprep.subr.mxu0 0.0
        %699 = vmatpush1.msra.mxu0 0.0
        %700 = vmatprep.subr.mxu0 0.0
        %701 = vmatpush1.msra.mxu0 0.0
        %702 = vmatprep.subr.mxu0 0.0
        %703 = vmatpush1.msra.mxu0 0.0
        %704 = vmatprep.subr.mxu0 0.0
        %705 = vmatpush1.msra.mxu0 0.0
        %706 = vmatprep.subr.mxu0 0.0
        %707 = vmatpush1.msra.mxu0 0.0
        %708 = vmatprep.subr.mxu0 0.0
        %709 = vmatpush1.msra.mxu0 0.0
        %710 = vmatprep.subr.mxu0 0.0
        %711 = vmatpush1.msra.mxu0 0.0
        %712 = vmatprep.subr.mxu0 0.0
        %713 = vmatpush1.msra.mxu0 0.0
        %714 = vmatprep.subr.mxu0 0.0
        %715 = vmatpush1.msra.mxu0 0.0
        %716 = vmatprep.subr.mxu0 0.0
        %717 = vmatpush1.msra.mxu0 0.0
        %718 = vmatprep.subr.mxu0 0.0
        %719 = vmatpush1.msra.mxu0 0.0
        %720 = vmatprep.subr.mxu0 0.0
        %721 = vmatpush1.msra.mxu0 0.0
        %722 = vmatprep.subr.mxu0 0.0
        %723 = vmatpush1.msra.mxu0 0.0
        %724 = vmatprep.subr.mxu0 0.0
        %725 = vmatpush1.msra.mxu0 0.0
        %726 = vmatprep.subr.mxu0 0.0
        %727 = vmatpush1.msra.mxu0 %v689
        %728 = vmatprep.subr.mxu0 0.0
        %729 = vmatpush2.msra.mxu0 0.0
        %730 = vmatprep.subr.mxu0 0.0
        %731 = vmatpush2.msra.mxu0 0.0
        %732 = vmatprep.subr.mxu0 0.0
        %733 = vmatpush2.msra.mxu0 0.0
        %734 = vmatprep.subr.mxu0 0.0
        %735 = vmatpush2.msra.mxu0 0.0
        %736 = vmatprep.subr.mxu0 0.0
        %737 = vmatpush2.msra.mxu0 0.0
        %738 = vmatprep.subr.mxu0 0.0
        %739 = vmatpush2.msra.mxu0 0.0
        %740 = vmatprep.subr.mxu0 0.0
        %741 = vmatpush2.msra.mxu0 0.0
        %742 = vmatprep.subr.mxu0 0.0
        %743 = vmatpush2.msra.mxu0 0.0
        %744 = vmatprep.subr.mxu0 0.0
        %745 = vmatpush2.msra.mxu0 0.0
        %746 = vmatprep.subr.mxu0 0.0
        %747 = vmatpush2.msra.mxu0 0.0
        %748 = vmatprep.subr.mxu0 0.0
        %749 = vmatpush2.msra.mxu0 0.0
        %750 = vmatprep.subr.mxu0 0.0
        %751 = vmatpush2.msra.mxu0 0.0
        %752 = vmatprep.subr.mxu0 0.0
        %753 = vmatpush2.msra.mxu0 0.0
        %754 = vmatprep.subr.mxu0 0.0
        %755 = vmatpush2.msra.mxu0 0.0
        %756 = vmatprep.subr.mxu0 0.0
        %757 = vmatpush2.msra.mxu0 0.0
        %758 = vmatprep.subr.mxu0 0.0
        %759 = vmatpush2.msra.mxu0 0.0
        %760 = vmatprep.mubr.f32.mxu0 0.0
        %761 = vmatmul.mubr.f32.gmra.mxu0 %v470
        %v762 = vpop.f32.mrf.mxu0
        %v763 = vadd.f32 %v695, %v762
        %v764 = vpop.f32.mrf.mxu0
        %765 = vmatprep.mubr.f32.mxu0 0.0
        %766 = vmatmul.mubr.f32.gmra.mxu0 %v473
        %v767 = vpop.f32.mrf.mxu0
        %v768 = vadd.f32 %v695, %v767
        %v769 = vpop.f32.mrf.mxu0
        %770 = vdwg.mxu0
        %v771 = vmax.f32 %v763, 0.0
        %v772 = vmax.f32 %v768, 0.0
        %v773 = vlaneseq
        %v774 = vshrl.u32 %v773, 7
        %v775 = vsub.s32 0, %v774
        %v776 = vrot.slane %v300, %v775
        %777 = vmatprep.subr.mxu0 0.0
        %778 = vmatpush1.msra.mxu0 %v299
        %779 = vmatprep.subr.mxu0 0.0
        %780 = vmatpush1.msra.mxu0 %v298
        %781 = vmatprep.subr.mxu0 0.0
        %782 = vmatpush1.msra.mxu0 %v297
        %783 = vmatprep.subr.mxu0 0.0
        %784 = vmatpush1.msra.mxu0 %v296
        %785 = vmatprep.subr.mxu0 0.0
        %786 = vmatpush1.msra.mxu0 %v295
        %787 = vmatprep.subr.mxu0 0.0
        %788 = vmatpush1.msra.mxu0 %v294
        %789 = vmatprep.subr.mxu0 0.0
        %790 = vmatpush1.msra.mxu0 %v293
        %791 = vmatprep.subr.mxu0 0.0
        %792 = vmatpush1.msra.mxu0 %v292
        %793 = vmatprep.subr.mxu0 0.0
        %794 = vmatpush1.msra.mxu0 %v291
        %795 = vmatprep.subr.mxu0 0.0
        %796 = vmatpush1.msra.mxu0 %v290
        %797 = vmatprep.subr.mxu0 0.0
        %798 = vmatpush1.msra.mxu0 %v289
        %799 = vmatprep.subr.mxu0 0.0
        %800 = vmatpush1.msra.mxu0 %v288
        %801 = vmatprep.subr.mxu0 0.0
        %802 = vmatpush1.msra.mxu0 %v287
        %803 = vmatprep.subr.mxu0 0.0
        %804 = vmatpush1.msra.mxu0 %v286
        %805 = vmatprep.subr.mxu0 0.0
        %806 = vmatpush1.msra.mxu0 %v285
        %807 = vmatprep.subr.mxu0 0.0
        %808 = vmatpush1.msra.mxu0 %v284
        %809 = vmatprep.subr.mxu0 0.0
        %810 = vmatpush2.msra.mxu0 0.0
        %811 = vmatprep.subr.mxu0 0.0
        %812 = vmatpush2.msra.mxu0 0.0
        %813 = vmatprep.subr.mxu0 0.0
        %814 = vmatpush2.msra.mxu0 0.0
        %815 = vmatprep.subr.mxu0 0.0
        %816 = vmatpush2.msra.mxu0 0.0
        %817 = vmatprep.subr.mxu0 0.0
        %818 = vmatpush2.msra.mxu0 0.0
        %819 = vmatprep.subr.mxu0 0.0
        %820 = vmatpush2.msra.mxu0 0.0
        %821 = vmatprep.subr.mxu0 0.0
        %822 = vmatpush2.msra.mxu0 0.0
        %823 = vmatprep.subr.mxu0 0.0
        %824 = vmatpush2.msra.mxu0 0.0
        %825 = vmatprep.subr.mxu0 0.0
        %826 = vmatpush2.msra.mxu0 0.0
        %827 = vmatprep.subr.mxu0 0.0
        %828 = vmatpush2.msra.mxu0 0.0
        %829 = vmatprep.subr.mxu0 0.0
        %830 = vmatpush2.msra.mxu0 0.0
        %831 = vmatprep.subr.mxu0 0.0
        %832 = vmatpush2.msra.mxu0 0.0
        %833 = vmatprep.subr.mxu0 0.0
        %834 = vmatpush2.msra.mxu0 0.0
        %835 = vmatprep.subr.mxu0 0.0
        %836 = vmatpush2.msra.mxu0 0.0
        %837 = vmatprep.subr.mxu0 0.0
        %838 = vmatpush2.msra.mxu0 0.0
        %839 = vmatprep.subr.mxu0 0.0
        %840 = vmatpush2.msra.mxu0 0.0
        %841 = vmatprep.mubr.f32.mxu0 0.0
        %842 = vmatmul.mubr.f32.gmra.mxu0 %v771
        %v843 = vpop.f32.mrf.mxu0
        %v844 = vadd.f32 %v776, %v843
        %v845 = vpop.f32.mrf.mxu0
        %846 = vmatprep.mubr.f32.mxu0 0.0
        %847 = vmatmul.mubr.f32.gmra.mxu0 %v772
        %v848 = vpop.f32.mrf.mxu0
        %v849 = vadd.f32 %v776, %v848
        %v850 = vpop.f32.mrf.mxu0
        %851 = vdwg.mxu0
        %v852 = vmax.f32 %v844, 0.0
        %v853 = vmax.f32 %v849, 0.0
        %v854 = vlaneseq
        %v855 = vshrl.u32 %v854, 7
        %v856 = vsub.s32 0, %v855
        %v857 = vrot.slane %v317, %v856
        %858 = vmatprep.subr.mxu0 0.0
        %859 = vmatpush1.msra.mxu0 %v316
        %860 = vmatprep.subr.mxu0 0.0
        %861 = vmatpush1.msra.mxu0 %v315
        %862 = vmatprep.subr.mxu0 0.0
        %863 = vmatpush1.msra.mxu0 %v314
        %864 = vmatprep.subr.mxu0 0.0
        %865 = vmatpush1.msra.mxu0 %v313
        %866 = vmatprep.subr.mxu0 0.0
        %867 = vmatpush1.msra.mxu0 %v312
        %868 = vmatprep.subr.mxu0 0.0
        %869 = vmatpush1.msra.mxu0 %v311
        %870 = vmatprep.subr.mxu0 0.0
        %871 = vmatpush1.msra.mxu0 %v310
        %872 = vmatprep.subr.mxu0 0.0
        %873 = vmatpush1.msra.mxu0 %v309
        %874 = vmatprep.subr.mxu0 0.0
        %875 = vmatpush1.msra.mxu0 %v308
        %876 = vmatprep.subr.mxu0 0.0
        %877 = vmatpush1.msra.mxu0 %v307
        %878 = vmatprep.subr.mxu0 0.0
        %879 = vmatpush1.msra.mxu0 %v306
        %880 = vmatprep.subr.mxu0 0.0
        %881 = vmatpush1.msra.mxu0 %v305
        %882 = vmatprep.subr.mxu0 0.0
        %883 = vmatpush1.msra.mxu0 %v304
        %884 = vmatprep.subr.mxu0 0.0
        %885 = vmatpush1.msra.mxu0 %v303
        %886 = vmatprep.subr.mxu0 0.0
        %887 = vmatpush1.msra.mxu0 %v302
        %888 = vmatprep.subr.mxu0 0.0
        %889 = vmatpush1.msra.mxu0 %v301
        %890 = vmatprep.subr.mxu0 0.0
        %891 = vmatpush2.msra.mxu0 0.0
        %892 = vmatprep.subr.mxu0 0.0
        %893 = vmatpush2.msra.mxu0 0.0
        %894 = vmatprep.subr.mxu0 0.0
        %895 = vmatpush2.msra.mxu0 0.0
        %896 = vmatprep.subr.mxu0 0.0
        %897 = vmatpush2.msra.mxu0 0.0
        %898 = vmatprep.subr.mxu0 0.0
        %899 = vmatpush2.msra.mxu0 0.0
        %900 = vmatprep.subr.mxu0 0.0
        %901 = vmatpush2.msra.mxu0 0.0
        %902 = vmatprep.subr.mxu0 0.0
        %903 = vmatpush2.msra.mxu0 0.0
        %904 = vmatprep.subr.mxu0 0.0
        %905 = vmatpush2.msra.mxu0 0.0
        %906 = vmatprep.subr.mxu0 0.0
        %907 = vmatpush2.msra.mxu0 0.0
        %908 = vmatprep.subr.mxu0 0.0
        %909 = vmatpush2.msra.mxu0 0.0
        %910 = vmatprep.subr.mxu0 0.0
        %911 = vmatpush2.msra.mxu0 0.0
        %912 = vmatprep.subr.mxu0 0.0
        %913 = vmatpush2.msra.mxu0 0.0
        %914 = vmatprep.subr.mxu0 0.0
        %915 = vmatpush2.msra.mxu0 0.0
        %916 = vmatprep.subr.mxu0 0.0
        %917 = vmatpush2.msra.mxu0 0.0
        %918 = vmatprep.subr.mxu0 0.0
        %919 = vmatpush2.msra.mxu0 0.0
        %920 = vmatprep.subr.mxu0 0.0
        %921 = vmatpush2.msra.mxu0 0.0
        %922 = vmatprep.mubr.f32.mxu0 0.0
        %923 = vmatmul.mubr.f32.gmra.mxu0 %v852
        %v924 = vpop.f32.mrf.mxu0
        %v925 = vadd.f32 %v857, %v924
        %v926 = vpop.f32.mrf.mxu0
        %927 = vmatprep.mubr.f32.mxu0 0.0
        %928 = vmatmul.mubr.f32.gmra.mxu0 %v853
        %v929 = vpop.f32.mrf.mxu0
        %v930 = vadd.f32 %v857, %v929
        %v931 = vpop.f32.mrf.mxu0
        %932 = vdwg.mxu0
        %933 = vst [vmem:[%s193] sm:$0xff] %v925
        %934 = vst [vmem:[%s193 + $0x8] sm:$0xff] %v930
        %s935 = sand.u32 %s99, 1
        %s936 = scalar_lea.sflag [#allocation4], %s935
        %s937 = sand.u32 %s99, 1
        %s938 = smul.addr %s937, 16
        %s939 = scalar_lea.vmem [#allocation5], %s938
        // Predicated region
        $region37: #{aal_hgcn_forward.1} parent=31 // pred_check
          %p940 = pneg %p109
        $region38: #{aal_hgcn_forward.1} parent=31 // pred_check_branch
          %942 = sbr.rel (%p940) target = $region40
        $region39: #{aal_hgcn_forward.1} parent=31 // pred_region
          %s944 = ssub.s32 256, 256
          %945 = vsyncadd %s936, %s944
          %s946 = smul.addr %s18, 2
          %s947 = smul.addr %s946, 128
          %s948 = scalar_lea.hbm %s3, %s947
          %s949 = sshll.u32 %s939, 4
          %s950 = int_to_ptr.vmem [resolvable:$true] %s949
          %955 = dma.vmem_to_hbm [thread:$0]  %s950, 256, %s948, %s936, 128, 128, 8
        $region40: #{aal_hgcn_forward.1} parent=31 // pred_fallthru
          _
      $region32: #{aal_hgcn_forward.1} parent=5 // pred_fallthru
        _
      %p956 = scmp.le.s32.totalorder 2, %s13
      // Predicated region
      $region41: #{aal_hgcn_forward.1} parent=5 // pred_check
        %p957 = pneg %p956
      $region42: #{aal_hgcn_forward.1} parent=5 // pred_check_branch
        %959 = sbr.rel (%p957) target = $region44
      $region43: #{aal_hgcn_forward.1} parent=5 // pred_region
        %s960 = ssub.s32 %s13, 2
        // Predicated region
        $region45: #{aal_hgcn_forward.1} parent=43 // pred_check
          %p961 = pneg %p115
        $region46: #{aal_hgcn_forward.1} parent=43 // pred_check_branch
          %963 = sbr.rel (%p961) target = $region48
        $region47: #{aal_hgcn_forward.1} parent=43 // pred_region
          %s964 = sand.u32 %s100, 1
          %s965 = scalar_lea.sflag [#allocation4], %s964
          %s966 = sand.u32 %s100, 1
          %s967 = smul.addr %s966, 16
          %s968 = scalar_lea.vmem [#allocation5], %s967
          %969 = dma.done %s965, 256
        $region48: #{aal_hgcn_forward.1} parent=43 // pred_fallthru
          _
      $region44: #{aal_hgcn_forward.1} parent=5 // pred_fallthru
        _
    $region6: #{aal_hgcn_forward.1} parent=1 // loop_footer
      %s17 = sadd.s32 1, %s13
    $region7: #{aal_hgcn_forward.1} parent=1 // loop_footer_branch
      %12 = sbr.rel target = $region3
    $region8: #{aal_hgcn_forward.1} parent=1 // loop_exit
      _
    %970 = vsyncpa [#allocation3], 1
    %s971 = scalar_lea.sflag [#allocation3], 1
    %972 = vsyncpa %s971, 1
    %973 = vsyncpa [#allocation4], 1
    %s974 = scalar_lea.sflag [#allocation4], 1
    %975 = vsyncpa %s974, 1

</llo_original>
